<compile_context>
chip_gen: v5e
topology: v5e:2x2
jax: 0.10.0
libtpu: 0.0.40
codegen_flags: <defaults>
</compile_context>

<pallas_src>
import functools

import jax
import jax.numpy as jnp
from jax.experimental import pallas as pl
from jax.experimental.pallas import tpu as pltpu

LANES = 128
MAX_TILE_ROWS = 4096  # (4096, 128) f32 = 2 MiB per input block


def _partial_sq_sum_kernel(a_ref, b_ref, o_ref, *, rows, tile_rows, needs_mask):
    """Per-tile sum of squared differences, reduced to an (8, 128) partial."""
    d = a_ref[...].astype(jnp.float32) - b_ref[...].astype(jnp.float32)
    sq = d * d

    if needs_mask:
        # Last tile may extend past the array; mask out-of-range rows so any
        # garbage in the ragged part of the block contributes nothing.
        i = pl.program_id(0)
        row_ids = jax.lax.broadcasted_iota(jnp.int32, (tile_rows, LANES), 0)
        valid = (i * tile_rows + row_ids) < rows
        sq = jnp.where(valid, sq, jnp.float32(0.0))

    # (tile_rows, 128) -> (tile_rows//8, 8, 128) -> sum over leading axis.
    # Each (8, 128) slice is one vreg, so this is pure VPU adds; the single
    # cross-lane reduction happens in the wrapper on a tiny (n_tiles, 8, 128)
    # array.
    partial = jnp.sum(sq.reshape(tile_rows // 8, 8, LANES), axis=0)
    o_ref[...] = partial[None]


def _aligned_sq_sum(a2, b2, rows):
    """Sum of squared differences over a (rows, 128) slab, rows % 8 == 0."""
    tile_rows = min(MAX_TILE_ROWS, rows)     # multiple of 8
    n_tiles = pl.cdiv(rows, tile_rows)
    needs_mask = (rows % tile_rows) != 0

    kernel = functools.partial(
        _partial_sq_sum_kernel,
        rows=rows,
        tile_rows=tile_rows,
        needs_mask=needs_mask,
    )

    out_bytes = n_tiles * 8 * LANES * 4
    partials = pl.pallas_call(
        kernel,
        out_shape=jax.ShapeDtypeStruct((n_tiles, 8, LANES), jnp.float32),
        grid_spec=pltpu.PrefetchScalarGridSpec(
            num_scalar_prefetch=0,
            grid=(n_tiles,),
            in_specs=[
                pl.BlockSpec((tile_rows, LANES), lambda i: (i, 0)),
                pl.BlockSpec((tile_rows, LANES), lambda i: (i, 0)),
            ],
            out_specs=pl.BlockSpec((1, 8, LANES), lambda i: (i, 0, 0)),
        ),
        compiler_params=pltpu.CompilerParams(
            dimension_semantics=("parallel",),
        ),
        cost_estimate=pl.CostEstimate(
            flops=3 * rows * LANES,
            transcendentals=0,
            bytes_accessed=a2.nbytes + b2.nbytes + out_bytes,
        ),
    )(a2, b2)

    return jnp.sum(partials, dtype=jnp.float32)


@jax.jit
def invertibility_loss(input_img, restored_img):
    """MSE(input_img, restored_img) with 'mean' reduction, computed in Pallas."""
    assert input_img.shape == restored_img.shape
    n_elems = input_img.size

    a = input_img.reshape(-1)
    b = restored_img.reshape(-1)

    # Split into an (8*128)-aligned prefix (kernel) and a tiny ragged tail
    # (< 1024 elements, summed directly) -- avoids padding the whole array.
    chunk = 8 * LANES
    n_main = (n_elems // chunk) * chunk

    sq_sum = jnp.float32(0.0)
    if n_main > 0:
        rows = n_main // LANES  # multiple of 8
        a2 = a[:n_main].reshape(rows, LANES)
        b2 = b[:n_main].reshape(rows, LANES)
        sq_sum = sq_sum + _aligned_sq_sum(a2, b2, rows)

    if n_main < n_elems:
        ta = a[n_main:].astype(jnp.float32)
        tb = b[n_main:].astype(jnp.float32)
        sq_sum = sq_sum + jnp.sum((ta - tb) * (ta - tb), dtype=jnp.float32)

    return (sq_sum / jnp.float32(n_elems)).astype(jnp.float32)


if __name__ == "__main__":
    key = jax.random.PRNGKey(0)
    k1, k2, k3, k4 = jax.random.split(key, 4)

    # Small NCHW images consistent with the module's forward signature.
    input_img = jax.random.normal(k1, (2, 4, 16, 16), dtype=jnp.float32)
    restored_img = jax.random.normal(k2, (2, 4, 16, 16), dtype=jnp.float32)

    loss = invertibility_loss(input_img, restored_img)
    jax.block_until_ready(loss)
    ref = jnp.mean((input_img - restored_img) ** 2)
    assert jnp.allclose(loss, ref, rtol=1e-6, atol=1e-6), (loss, ref)

    # Unaligned (non-multiple-of-1024) shape exercises the tail path.
    x = jax.random.normal(k3, (2, 3, 17, 19), dtype=jnp.float32)
    y = jax.random.normal(k4, (2, 3, 17, 19), dtype=jnp.float32)
    loss2 = invertibility_loss(x, y)
    jax.block_until_ready(loss2)
    ref2 = jnp.mean((x - y) ** 2)
    assert jnp.allclose(loss2, ref2, rtol=1e-6, atol=1e-6), (loss2, ref2)

    print("KERNEL_OK")
</pallas_src>

<mosaic_0001>
module attributes {stable_mosaic.version = 11 : i64} {
  func.func @_partial_sq_sum_kernel(%arg0: i32, %arg1: memref<16x128xf32, #tpu.memory_space<vmem>>, %arg2: memref<16x128xf32, #tpu.memory_space<vmem>>, %arg3: memref<1x8x128xf32, #tpu.memory_space<vmem>>) attributes {dimension_semantics = [#tpu.dimension_semantics<parallel>], iteration_bounds = array<i64: 1>, scalar_prefetch = 0 : i64, scratch_operands = 0 : i64, tpu.core_type = #tpu.core_type<tc>, window_params = [{transform_indices = @transform_0, window_bounds = array<i64: 16, 128>}, {transform_indices = @transform_1, window_bounds = array<i64: 16, 128>}, {transform_indices = @transform_2, window_bounds = array<i64: 1, 8, 128>}]} {
    %c0 = arith.constant 0 : index
    %c0_0 = arith.constant 0 : index
    %0 = vector.load %arg1[%c0, %c0_0] : memref<16x128xf32, #tpu.memory_space<vmem>>, vector<16x128xf32>
    %c0_1 = arith.constant 0 : index
    %c0_2 = arith.constant 0 : index
    %1 = vector.load %arg2[%c0_1, %c0_2] : memref<16x128xf32, #tpu.memory_space<vmem>>, vector<16x128xf32>
    %2 = arith.subf %0, %1 : vector<16x128xf32>
    %3 = arith.mulf %2, %2 : vector<16x128xf32>
    %4 = vector.shape_cast %3 : vector<16x128xf32> to vector<2x8x128xf32>
    %cst = arith.constant dense<0.000000e+00> : vector<8x128xf32>
    %5 = vector.multi_reduction <add>, %4, %cst [0] : vector<2x8x128xf32> to vector<8x128xf32>
    %6 = vector.shape_cast %5 : vector<8x128xf32> to vector<1x8x128xf32>
    %c0_3 = arith.constant 0 : index
    %c0_4 = arith.constant 0 : index
    %c0_5 = arith.constant 0 : index
    %7 = vector.load %arg3[%c0_3, %c0_4, %c0_5] : memref<1x8x128xf32, #tpu.memory_space<vmem>>, vector<1x8x128xf32>
    tpu.vector_store %arg3[%c0_3, %c0_4, %c0_5], %6 {strides = array<i32>} : memref<1x8x128xf32, #tpu.memory_space<vmem>>, vector<1x8x128xf32>,
    return
  }
  func.func @transform_0(%arg0: i32) -> (i32, i32) {
    %c0_i32 = arith.constant 0 : i32
    %c0_i32_0 = arith.constant 0 : i32
    return %arg0, %c0_i32 : i32, i32
  }
  func.func @transform_1(%arg0: i32) -> (i32, i32) {
    %c0_i32 = arith.constant 0 : i32
    %c0_i32_0 = arith.constant 0 : i32
    return %arg0, %c0_i32 : i32, i32
  }
  func.func @transform_2(%arg0: i32) -> (i32, i32, i32) {
    %c0_i32 = arith.constant 0 : i32
    %c0_i32_0 = arith.constant 0 : i32
    %c0_i32_1 = arith.constant 0 : i32
    return %arg0, %c0_i32, %c0_i32_0 : i32, i32, i32
  }
}

</mosaic_0001>

<llo_original>
// kernel: invertibility_loss.1
$region0: #{invertibility_loss.1}
  #allocation0 [shape = 'u32[]', space=smem, size = 0x4, offset = 0x4, fixed_abs, tag = 'smem constant byte address 0x4 - core index']
  #allocation1 [shape = 'u32[72,128]{1,0:T(1,128)}', space=vmem, size = 0x9000, scoped, tag = 'internal scratch']
  %s0 = inlined_call_operand.vmem [shape: f32[16,128], index: 0, kind: input, shape index: {}]
  %s1 = inlined_call_operand.vmem [shape: f32[16,128], index: 1, kind: input, shape index: {}]
  %s2 = inlined_call_operand.vmem [shape: f32[1,8,128], index: 2, kind: output, shape index: {}]
  %s3 = sld [smem:[#allocation0]]
  $region18: #{invertibility_loss.1} parent=0
    _
  %s5 = ssub.s32 1, %s3
  %s6 = scalar_select 0, %s5, %s3
  // Predicated region
  $region2: #{invertibility_loss.1} parent=0 // pred_check
    _
  $region3: #{invertibility_loss.1} parent=0 // pred_check_branch
    %8 = sbr.rel (0) target = $region5
  $region4: #{invertibility_loss.1} parent=0 // pred_region
    _
  $region5: #{invertibility_loss.1} parent=0 // pred_fallthru
    _
  // Predicated region
  $region6: #{invertibility_loss.1} parent=0 // pred_check
    _
  $region7: #{invertibility_loss.1} parent=0 // pred_check_branch
    %10 = sbr.rel (0) target = $region9
  $region8: #{invertibility_loss.1} parent=0 // pred_region
    _
  $region9: #{invertibility_loss.1} parent=0 // pred_fallthru
    _
  %v11 = vld [vmem:[%s0] sm:$0xff]
  %v12 = vld [vmem:[%s0 + $0x8] sm:$0xff]
  %v13 = vld [vmem:[%s1] sm:$0xff]
  %v14 = vld [vmem:[%s1 + $0x8] sm:$0xff]
  %v15 = vsub.f32 %v11, %v13
  %v16 = vsub.f32 %v12, %v14
  %v17 = vmul.f32 %v15, %v15
  %v18 = vmul.f32 %v16, %v16
  %v19 = vadd.f32 %v17, %v18
  %20 = vst [vmem:[%s2] sm:$0xff] %v19
  // Predicated region
  $region10: #{invertibility_loss.1} parent=0 // pred_check
    _
  $region11: #{invertibility_loss.1} parent=0 // pred_check_branch
    %22 = sbr.rel (0) target = $region13
  $region12: #{invertibility_loss.1} parent=0 // pred_region
    _
  $region13: #{invertibility_loss.1} parent=0 // pred_fallthru
    _
  // Predicated region
  $region14: #{invertibility_loss.1} parent=0 // pred_check
    _
  $region15: #{invertibility_loss.1} parent=0 // pred_check_branch
    %24 = sbr.rel (0) target = $region17
  $region16: #{invertibility_loss.1} parent=0 // pred_region
    _
  $region17: #{invertibility_loss.1} parent=0 // pred_fallthru
    _

</llo_original>
